<compile_context>
chip_gen: v7x
topology: tpu7x:2x2x1
jax: 0.10.0
libtpu: 0.0.40
codegen_flags: <defaults>
</compile_context>

<pallas_src>
import functools

import jax
import jax.numpy as jnp
from jax.experimental import pallas as pl
from jax.experimental.pallas import tpu as pltpu

_LANES = 128
_SUBLANES = 8


def _outconv_vpu_kernel(x_ref, w_ref, b_ref, o_ref):
    """Tiny-channel 1x1 conv: unrolled VPU broadcast-FMA on full (S,128) planes.

    x_ref: (1, C_in, S, 128)  VMEM
    w_ref: (C_out, C_in)      SMEM  (scalar reads -> sreg->vreg broadcast)
    b_ref: (C_out,)           SMEM
    o_ref: (1, C_out, S, 128) VMEM
    """
    c_out, c_in = w_ref.shape
    for o in range(c_out):
        # Bias folded into the first FMA; each operand is a dense (S,128) tile.
        acc = x_ref[0, 0] * w_ref[o, 0] + b_ref[o]
        for c in range(1, c_in):
            acc = acc + x_ref[0, c] * w_ref[o, c]
        o_ref[0, o] = acc.astype(o_ref.dtype)  # direct per-channel store, no concat


def _outconv_mxu_kernel(x_ref, w_ref, b_ref, o_ref):
    """Large-channel fallback: one (C_out,C_in) @ (C_in,S*128) MXU matmul per step.

    x_ref: (1, C_in, S, 128)  VMEM
    w_ref: (C_out, C_in)      VMEM (f32)
    b_ref: (C_out, 1)         VMEM (f32)
    o_ref: (1, C_out, S, 128) VMEM
    """
    _, c_in, s, l = x_ref.shape
    c_out = w_ref.shape[0]
    x2 = x_ref[0].reshape(c_in, s * l).astype(jnp.float32)
    acc = jnp.dot(w_ref[...], x2, preferred_element_type=jnp.float32)
    acc = acc + b_ref[...]                       # (C_out, 1) broadcasts over lanes
    o_ref[0] = acc.reshape(c_out, s, l).astype(o_ref.dtype)


def _round_up(a, b):
    return -(-a // b) * b


def _vmem_capacity_bytes():
    """Trace-time chip query with a conservative (v7x-sized) fallback."""
    try:
        info = pltpu.get_tpu_info()
        cap = int(getattr(info, "vmem_capacity_bytes", 0) or 0)
        if cap > 0:
            return cap
    except Exception:
        pass
    return 64 * 1024 * 1024


def _pick_sublane_tile(r, s_cap, min_row_blocks):
    """Largest multiple-of-8 sublane tile dividing r (full r when r <= 8)."""
    if r <= _SUBLANES:
        return r                                   # block == full dim -> legal
    cap = min(r // max(min_row_blocks, 1), s_cap)
    s = max(_SUBLANES, (cap // _SUBLANES) * _SUBLANES)
    while s > _SUBLANES and r % s != 0:            # r is a multiple of 8, so s=8 always works
        s -= _SUBLANES
    return s


@functools.partial(jax.jit, static_argnames=("vmem_budget_bytes",))
def outconv_forward(x_nchw, weight, bias, *, vmem_budget_bytes=None):
    """outconv.forward: 1x1 Conv2d.

    x_nchw: (N, C_in, H, W)
    weight: (C_out, C_in, 1, 1)   -- PyTorch Conv2d weight layout
    bias:   (C_out,)
    returns (N, C_out, H, W)
    """
    N, C_in, H, W = x_nchw.shape
    C_out = weight.shape[0]
    HW = H * W
    itemsize = x_nchw.dtype.itemsize

    # ---- chip-aware VMEM sizing -------------------------------------------
    cap = _vmem_capacity_bytes()
    if vmem_budget_bytes is None:
        budget = min(cap // 4, 24 * 1024 * 1024)   # ~16 MiB on v7x, 24 MiB on v5e/v6e
    else:
        budget = int(vmem_budget_bytes)
    vmem_limit = int(min(max(2 * budget, 32 * 1024 * 1024), cap // 2))

    # ---- lane/sublane-dense re-layout: (N,C,H,W) -> (N,C,R,128) ------------
    r_raw = (HW + _LANES - 1) // _LANES
    R = r_raw if r_raw <= _SUBLANES else _round_up(r_raw, _SUBLANES)
    HW_pad = R * _LANES

    x3 = x_nchw.reshape(N, C_in, HW)
    if HW_pad != HW:
        x3 = jnp.pad(x3, ((0, 0), (0, 0), (0, HW_pad - HW)))
    x4 = x3.reshape(N, C_in, R, _LANES)

    # ---- tile sizing (input + output block, double buffered, no padding) ---
    bytes_per_row = (C_in + C_out) * _LANES * itemsize * 2
    s_cap = max(_SUBLANES, budget // max(bytes_per_row, 1))
    # Keep >= 2 grid steps when possible so v7x's two TensorCores both get work.
    min_row_blocks = 2 if (N == 1 and R > _SUBLANES) else 1
    S = _pick_sublane_tile(R, s_cap, min_row_blocks)
    n_r = R // S

    w2 = weight.reshape(C_out, C_in).astype(jnp.float32)
    b1 = bias.astype(jnp.float32)

    # VPU broadcast-FMA only for truly tiny channel counts; MXU otherwise.
    use_vpu = (C_in * C_out) <= 64

    if use_vpu:
        kernel = _outconv_vpu_kernel
        w_arg, b_arg = w2, b1
        w_spec = pl.BlockSpec(memory_space=pltpu.MemorySpace.SMEM)
        b_spec = pl.BlockSpec(memory_space=pltpu.MemorySpace.SMEM)
    else:
        kernel = _outconv_mxu_kernel
        w_arg, b_arg = w2, b1.reshape(C_out, 1)
        w_spec = pl.BlockSpec((C_out, C_in), lambda n, r: (0, 0))
        b_spec = pl.BlockSpec((C_out, 1), lambda n, r: (0, 0))

    out4 = pl.pallas_call(
        kernel,
        out_shape=jax.ShapeDtypeStruct((N, C_out, R, _LANES), x_nchw.dtype),
        grid_spec=pltpu.PrefetchScalarGridSpec(
            num_scalar_prefetch=0,
            grid=(N, n_r),
            in_specs=[
                pl.BlockSpec((1, C_in, S, _LANES), lambda n, r: (n, 0, r, 0)),
                w_spec,
                b_spec,
            ],
            out_specs=pl.BlockSpec((1, C_out, S, _LANES), lambda n, r: (n, 0, r, 0)),
        ),
        compiler_params=pltpu.CompilerParams(
            dimension_semantics=("parallel", "parallel"),
            vmem_limit_bytes=vmem_limit,
        ),
    )(x4, w_arg, b_arg)

    # (N, C_out, R, 128) -> (N, C_out, HW_pad) -> crop pad -> (N, C_out, H, W)
    out3 = out4.reshape(N, C_out, HW_pad)
    if HW_pad != HW:
        out3 = out3[:, :, :HW]
    return out3.reshape(N, C_out, H, W)


if __name__ == "__main__":
    # outconv(in_ch=4, out_ch=3)
    in_ch, out_ch = 4, 3
    N, H, W = 2, 16, 16

    key = jax.random.PRNGKey(0)
    kx, kw, kb = jax.random.split(key, 3)

    x = jax.random.normal(kx, (N, in_ch, H, W), dtype=jnp.float32)
    weight = jax.random.normal(kw, (out_ch, in_ch, 1, 1), dtype=jnp.float32) * 0.1
    bias = jax.random.normal(kb, (out_ch,), dtype=jnp.float32) * 0.1

    y = outconv_forward(x, weight, bias)
    y = jax.block_until_ready(y)

    # Reference check against plain-JAX 1x1 conv semantics.
    ref = (
        jnp.einsum("nchw,oc->nohw", x, weight.reshape(out_ch, in_ch))
        + bias.reshape(1, out_ch, 1, 1)
    )
    assert y.shape == (N, out_ch, H, W)
    assert jnp.allclose(y, ref, atol=1e-5, rtol=1e-5)

    print("KERNEL_OK")
</pallas_src>

<mosaic_0001>
module attributes {stable_mosaic.version = 11 : i64} {
  func.func @_outconv_vpu_kernel(%arg0: i32, %arg1: i32, %arg2: memref<1x4x2x128xf32, #tpu.memory_space<vmem>>, %arg3: memref<3x4xf32, #tpu.memory_space<smem>>, %arg4: memref<3xf32, #tpu.memory_space<smem>>, %arg5: memref<1x3x2x128xf32, #tpu.memory_space<vmem>>) attributes {dimension_semantics = [#tpu.dimension_semantics<parallel>, #tpu.dimension_semantics<parallel>], iteration_bounds = array<i64: 2, 1>, scalar_prefetch = 0 : i64, scratch_operands = 0 : i64, tpu.core_type = #tpu.core_type<tc>, window_params = [{transform_indices = @transform_0, window_bounds = array<i64: 1, 4, 2, 128>}, {transform_indices = @transform_1, window_bounds = array<i64: 3, 4>}, {transform_indices = @transform_2, window_bounds = array<i64: 3>}, {transform_indices = @transform_3, window_bounds = array<i64: 1, 3, 2, 128>}]} {
    %c0 = arith.constant 0 : index
    %c0_0 = arith.constant 0 : index
    %c0_1 = arith.constant 0 : index
    %c0_2 = arith.constant 0 : index
    %0 = vector.load %arg2[%c0, %c0_0, %c0_1, %c0_2] : memref<1x4x2x128xf32, #tpu.memory_space<vmem>>, vector<1x1x2x128xf32>
    %1 = vector.shape_cast %0 : vector<1x1x2x128xf32> to vector<2x128xf32>
    %c0_3 = arith.constant 0 : index
    %c0_4 = arith.constant 0 : index
    %2 = memref.load %arg3[%c0_3, %c0_4] : memref<3x4xf32, #tpu.memory_space<smem>>
    %3 = vector.broadcast %2 : f32 to vector<2x128xf32>
    %4 = arith.mulf %1, %3 : vector<2x128xf32>
    %c0_5 = arith.constant 0 : index
    %5 = memref.load %arg4[%c0_5] : memref<3xf32, #tpu.memory_space<smem>>
    %6 = vector.broadcast %5 : f32 to vector<2x128xf32>
    %7 = arith.addf %4, %6 : vector<2x128xf32>
    %c0_6 = arith.constant 0 : index
    %c1 = arith.constant 1 : index
    %c0_7 = arith.constant 0 : index
    %c0_8 = arith.constant 0 : index
    %8 = vector.load %arg2[%c0_6, %c1, %c0_7, %c0_8] : memref<1x4x2x128xf32, #tpu.memory_space<vmem>>, vector<1x1x2x128xf32>
    %9 = vector.shape_cast %8 : vector<1x1x2x128xf32> to vector<2x128xf32>
    %c0_9 = arith.constant 0 : index
    %c1_10 = arith.constant 1 : index
    %10 = memref.load %arg3[%c0_9, %c1_10] : memref<3x4xf32, #tpu.memory_space<smem>>
    %11 = vector.broadcast %10 : f32 to vector<2x128xf32>
    %12 = arith.mulf %9, %11 : vector<2x128xf32>
    %13 = arith.addf %7, %12 : vector<2x128xf32>
    %c0_11 = arith.constant 0 : index
    %c2 = arith.constant 2 : index
    %c0_12 = arith.constant 0 : index
    %c0_13 = arith.constant 0 : index
    %14 = vector.load %arg2[%c0_11, %c2, %c0_12, %c0_13] : memref<1x4x2x128xf32, #tpu.memory_space<vmem>>, vector<1x1x2x128xf32>
    %15 = vector.shape_cast %14 : vector<1x1x2x128xf32> to vector<2x128xf32>
    %c0_14 = arith.constant 0 : index
    %c2_15 = arith.constant 2 : index
    %16 = memref.load %arg3[%c0_14, %c2_15] : memref<3x4xf32, #tpu.memory_space<smem>>
    %17 = vector.broadcast %16 : f32 to vector<2x128xf32>
    %18 = arith.mulf %15, %17 : vector<2x128xf32>
    %19 = arith.addf %13, %18 : vector<2x128xf32>
    %c0_16 = arith.constant 0 : index
    %c3 = arith.constant 3 : index
    %c0_17 = arith.constant 0 : index
    %c0_18 = arith.constant 0 : index
    %20 = vector.load %arg2[%c0_16, %c3, %c0_17, %c0_18] : memref<1x4x2x128xf32, #tpu.memory_space<vmem>>, vector<1x1x2x128xf32>
    %21 = vector.shape_cast %20 : vector<1x1x2x128xf32> to vector<2x128xf32>
    %c0_19 = arith.constant 0 : index
    %c3_20 = arith.constant 3 : index
    %22 = memref.load %arg3[%c0_19, %c3_20] : memref<3x4xf32, #tpu.memory_space<smem>>
    %23 = vector.broadcast %22 : f32 to vector<2x128xf32>
    %24 = arith.mulf %21, %23 : vector<2x128xf32>
    %25 = arith.addf %19, %24 : vector<2x128xf32>
    %c0_21 = arith.constant 0 : index
    %c0_22 = arith.constant 0 : index
    %c0_23 = arith.constant 0 : index
    %c0_24 = arith.constant 0 : index
    %26 = vector.load %arg5[%c0_21, %c0_22, %c0_23, %c0_24] : memref<1x3x2x128xf32, #tpu.memory_space<vmem>>, vector<1x1x2x128xf32>
    %27 = vector.shape_cast %26 : vector<1x1x2x128xf32> to vector<2x128xf32>
    %28 = vector.shape_cast %25 : vector<2x128xf32> to vector<1x1x2x128xf32>
    tpu.vector_store %arg5[%c0_21, %c0_22, %c0_23, %c0_24], %28 {strides = array<i32>} : memref<1x3x2x128xf32, #tpu.memory_space<vmem>>, vector<1x1x2x128xf32>,
    %c0_25 = arith.constant 0 : index
    %c0_26 = arith.constant 0 : index
    %c0_27 = arith.constant 0 : index
    %c0_28 = arith.constant 0 : index
    %29 = vector.load %arg2[%c0_25, %c0_26, %c0_27, %c0_28] : memref<1x4x2x128xf32, #tpu.memory_space<vmem>>, vector<1x1x2x128xf32>
    %30 = vector.shape_cast %29 : vector<1x1x2x128xf32> to vector<2x128xf32>
    %c1_29 = arith.constant 1 : index
    %c0_30 = arith.constant 0 : index
    %31 = memref.load %arg3[%c1_29, %c0_30] : memref<3x4xf32, #tpu.memory_space<smem>>
    %32 = vector.broadcast %31 : f32 to vector<2x128xf32>
    %33 = arith.mulf %30, %32 : vector<2x128xf32>
    %c1_31 = arith.constant 1 : index
    %34 = memref.load %arg4[%c1_31] : memref<3xf32, #tpu.memory_space<smem>>
    %35 = vector.broadcast %34 : f32 to vector<2x128xf32>
    %36 = arith.addf %33, %35 : vector<2x128xf32>
    %c0_32 = arith.constant 0 : index
    %c1_33 = arith.constant 1 : index
    %c0_34 = arith.constant 0 : index
    %c0_35 = arith.constant 0 : index
    %37 = vector.load %arg2[%c0_32, %c1_33, %c0_34, %c0_35] : memref<1x4x2x128xf32, #tpu.memory_space<vmem>>, vector<1x1x2x128xf32>
    %38 = vector.shape_cast %37 : vector<1x1x2x128xf32> to vector<2x128xf32>
    %c1_36 = arith.constant 1 : index
    %c1_37 = arith.constant 1 : index
    %39 = memref.load %arg3[%c1_36, %c1_37] : memref<3x4xf32, #tpu.memory_space<smem>>
    %40 = vector.broadcast %39 : f32 to vector<2x128xf32>
    %41 = arith.mulf %38, %40 : vector<2x128xf32>
    %42 = arith.addf %36, %41 : vector<2x128xf32>
    %c0_38 = arith.constant 0 : index
    %c2_39 = arith.constant 2 : index
    %c0_40 = arith.constant 0 : index
    %c0_41 = arith.constant 0 : index
    %43 = vector.load %arg2[%c0_38, %c2_39, %c0_40, %c0_41] : memref<1x4x2x128xf32, #tpu.memory_space<vmem>>, vector<1x1x2x128xf32>
    %44 = vector.shape_cast %43 : vector<1x1x2x128xf32> to vector<2x128xf32>
    %c1_42 = arith.constant 1 : index
    %c2_43 = arith.constant 2 : index
    %45 = memref.load %arg3[%c1_42, %c2_43] : memref<3x4xf32, #tpu.memory_space<smem>>
    %46 = vector.broadcast %45 : f32 to vector<2x128xf32>
    %47 = arith.mulf %44, %46 : vector<2x128xf32>
    %48 = arith.addf %42, %47 : vector<2x128xf32>
    %c0_44 = arith.constant 0 : index
    %c3_45 = arith.constant 3 : index
    %c0_46 = arith.constant 0 : index
    %c0_47 = arith.constant 0 : index
    %49 = vector.load %arg2[%c0_44, %c3_45, %c0_46, %c0_47] : memref<1x4x2x128xf32, #tpu.memory_space<vmem>>, vector<1x1x2x128xf32>
    %50 = vector.shape_cast %49 : vector<1x1x2x128xf32> to vector<2x128xf32>
    %c1_48 = arith.constant 1 : index
    %c3_49 = arith.constant 3 : index
    %51 = memref.load %arg3[%c1_48, %c3_49] : memref<3x4xf32, #tpu.memory_space<smem>>
    %52 = vector.broadcast %51 : f32 to vector<2x128xf32>
    %53 = arith.mulf %50, %52 : vector<2x128xf32>
    %54 = arith.addf %48, %53 : vector<2x128xf32>
    %c0_50 = arith.constant 0 : index
    %c1_51 = arith.constant 1 : index
    %c0_52 = arith.constant 0 : index
    %c0_53 = arith.constant 0 : index
    %55 = vector.load %arg5[%c0_50, %c1_51, %c0_52, %c0_53] : memref<1x3x2x128xf32, #tpu.memory_space<vmem>>, vector<1x1x2x128xf32>
    %56 = vector.shape_cast %55 : vector<1x1x2x128xf32> to vector<2x128xf32>
    %57 = vector.shape_cast %54 : vector<2x128xf32> to vector<1x1x2x128xf32>
    tpu.vector_store %arg5[%c0_50, %c1_51, %c0_52, %c0_53], %57 {strides = array<i32>} : memref<1x3x2x128xf32, #tpu.memory_space<vmem>>, vector<1x1x2x128xf32>,
    %c0_54 = arith.constant 0 : index
    %c0_55 = arith.constant 0 : index
    %c0_56 = arith.constant 0 : index
    %c0_57 = arith.constant 0 : index
    %58 = vector.load %arg2[%c0_54, %c0_55, %c0_56, %c0_57] : memref<1x4x2x128xf32, #tpu.memory_space<vmem>>, vector<1x1x2x128xf32>
    %59 = vector.shape_cast %58 : vector<1x1x2x128xf32> to vector<2x128xf32>
    %c2_58 = arith.constant 2 : index
    %c0_59 = arith.constant 0 : index
    %60 = memref.load %arg3[%c2_58, %c0_59] : memref<3x4xf32, #tpu.memory_space<smem>>
    %61 = vector.broadcast %60 : f32 to vector<2x128xf32>
    %62 = arith.mulf %59, %61 : vector<2x128xf32>
    %c2_60 = arith.constant 2 : index
    %63 = memref.load %arg4[%c2_60] : memref<3xf32, #tpu.memory_space<smem>>
    %64 = vector.broadcast %63 : f32 to vector<2x128xf32>
    %65 = arith.addf %62, %64 : vector<2x128xf32>
    %c0_61 = arith.constant 0 : index
    %c1_62 = arith.constant 1 : index
    %c0_63 = arith.constant 0 : index
    %c0_64 = arith.constant 0 : index
    %66 = vector.load %arg2[%c0_61, %c1_62, %c0_63, %c0_64] : memref<1x4x2x128xf32, #tpu.memory_space<vmem>>, vector<1x1x2x128xf32>
    %67 = vector.shape_cast %66 : vector<1x1x2x128xf32> to vector<2x128xf32>
    %c2_65 = arith.constant 2 : index
    %c1_66 = arith.constant 1 : index
    %68 = memref.load %arg3[%c2_65, %c1_66] : memref<3x4xf32, #tpu.memory_space<smem>>
    %69 = vector.broadcast %68 : f32 to vector<2x128xf32>
    %70 = arith.mulf %67, %69 : vector<2x128xf32>
    %71 = arith.addf %65, %70 : vector<2x128xf32>
    %c0_67 = arith.constant 0 : index
    %c2_68 = arith.constant 2 : index
    %c0_69 = arith.constant 0 : index
    %c0_70 = arith.constant 0 : index
    %72 = vector.load %arg2[%c0_67, %c2_68, %c0_69, %c0_70] : memref<1x4x2x128xf32, #tpu.memory_space<vmem>>, vector<1x1x2x128xf32>
    %73 = vector.shape_cast %72 : vector<1x1x2x128xf32> to vector<2x128xf32>
    %c2_71 = arith.constant 2 : index
    %c2_72 = arith.constant 2 : index
    %74 = memref.load %arg3[%c2_71, %c2_72] : memref<3x4xf32, #tpu.memory_space<smem>>
    %75 = vector.broadcast %74 : f32 to vector<2x128xf32>
    %76 = arith.mulf %73, %75 : vector<2x128xf32>
    %77 = arith.addf %71, %76 : vector<2x128xf32>
    %c0_73 = arith.constant 0 : index
    %c3_74 = arith.constant 3 : index
    %c0_75 = arith.constant 0 : index
    %c0_76 = arith.constant 0 : index
    %78 = vector.load %arg2[%c0_73, %c3_74, %c0_75, %c0_76] : memref<1x4x2x128xf32, #tpu.memory_space<vmem>>, vector<1x1x2x128xf32>
    %79 = vector.shape_cast %78 : vector<1x1x2x128xf32> to vector<2x128xf32>
    %c2_77 = arith.constant 2 : index
    %c3_78 = arith.constant 3 : index
    %80 = memref.load %arg3[%c2_77, %c3_78] : memref<3x4xf32, #tpu.memory_space<smem>>
    %81 = vector.broadcast %80 : f32 to vector<2x128xf32>
    %82 = arith.mulf %79, %81 : vector<2x128xf32>
    %83 = arith.addf %77, %82 : vector<2x128xf32>
    %c0_79 = arith.constant 0 : index
    %c2_80 = arith.constant 2 : index
    %c0_81 = arith.constant 0 : index
    %c0_82 = arith.constant 0 : index
    %84 = vector.load %arg5[%c0_79, %c2_80, %c0_81, %c0_82] : memref<1x3x2x128xf32, #tpu.memory_space<vmem>>, vector<1x1x2x128xf32>
    %85 = vector.shape_cast %84 : vector<1x1x2x128xf32> to vector<2x128xf32>
    %86 = vector.shape_cast %83 : vector<2x128xf32> to vector<1x1x2x128xf32>
    tpu.vector_store %arg5[%c0_79, %c2_80, %c0_81, %c0_82], %86 {strides = array<i32>} : memref<1x3x2x128xf32, #tpu.memory_space<vmem>>, vector<1x1x2x128xf32>,
    return
  }
  func.func @transform_0(%arg0: i32, %arg1: i32) -> (i32, i32, i32, i32) {
    %c0_i32 = arith.constant 0 : i32
    %c0_i32_0 = arith.constant 0 : i32
    %c0_i32_1 = arith.constant 0 : i32
    return %arg0, %c0_i32, %arg1, %c0_i32_0 : i32, i32, i32, i32
  }
  func.func @transform_1(%arg0: i32, %arg1: i32) -> (i32, i32) {
    %c0_i32 = arith.constant 0 : i32
    %c0_i32_0 = arith.constant 0 : i32
    %c0_i32_1 = arith.constant 0 : i32
    return %c0_i32, %c0_i32_0 : i32, i32
  }
  func.func @transform_2(%arg0: i32, %arg1: i32) -> i32 {
    %c0_i32 = arith.constant 0 : i32
    %c0_i32_0 = arith.constant 0 : i32
    return %c0_i32 : i32
  }
  func.func @transform_3(%arg0: i32, %arg1: i32) -> (i32, i32, i32, i32) {
    %c0_i32 = arith.constant 0 : i32
    %c0_i32_0 = arith.constant 0 : i32
    %c0_i32_1 = arith.constant 0 : i32
    return %arg0, %c0_i32, %arg1, %c0_i32_0 : i32, i32, i32, i32
  }
}

</mosaic_0001>

<llo_original>
// kernel: outconv_forward.1
$region0: #{outconv_forward.1}
  #allocation0 [shape = 'u32[]', space=smem, size = 0x4, offset = 0x4, fixed_abs, tag = 'smem constant byte address 0x4 - core index']
  #allocation1 [shape = 'u32[144,128]{1,0:T(1,128)}', space=vmem, size = 0x12000, scoped, tag = 'internal scratch']
  %s0 = inlined_call_operand.vmem [shape: f32[2,4,2,128], index: 0, kind: input, shape index: {}]
  %s1 = inlined_call_operand.vmem [shape: f32[3,4], index: 1, kind: input, shape index: {}]
  %s2 = inlined_call_operand.vmem [shape: f32[3], index: 2, kind: input, shape index: {}]
  %s3 = inlined_call_operand.vmem [shape: f32[2,3,2,128], index: 3, kind: output, shape index: {}]
  %s4 = sld [smem:[#allocation0]]
  $region53: #{outconv_forward.1} parent=0
    _
  %s6 = ssub.s32 1, %s4
  %s7 = scalar_select 0, %s6, %s4
  $region1: #{outconv_forward.1} parent=0
    #allocation2 [shape = 'u8[2048]{0}', space=smem, size = 0x800, scoped, tag = 'input window, operand 1, single buffered']
    #allocation3 [shape = 's32[2]{0}', space=sflag, size = 0x8, scoped, tag = 'scoped memory for outconv_forward.1']
    #allocation4 [shape = 'u8[512]{0}', space=smem, size = 0x200, scoped, tag = 'input window, operand 2, single buffered']
    #allocation5 [shape = 's32[1]{0}', space=sflag, size = 0x4, scoped, tag = 'scoped memory for outconv_forward.1']
    %8 = vsyncpa [#allocation3], 0
    %9 = vsyncpa [#allocation5], 0
    loop: start=0, step=1, limit=4
    $region2: #{outconv_forward.1} parent=1 // loop_pre_header
      _
    $region3: #{outconv_forward.1} parent=1 // loop_header
      %s11 = sphi 0, %s15
      %p12 = scmp.ge.s32.totalorder %s11, 4
      %s18 = sphi 0, %s30
      %s19 = sphi 0, %s26
      %s20 = sphi 0, %s18
      %s21 = sphi 0, %s19
      %s22 = sphi 0, %s20
      %s23 = sphi 0, %s21
      %s35 = sphi 0, %s37
      %s38 = sphi 0, %s35
      %s39 = sphi 0, %s38
      %s55 = sphi 0, %s39
      %s59 = sphi 0, %s59
      %s61 = sphi 0, %s59
      %s62 = sphi 0, %s61
      %s76 = sphi 0, %s62
      %s80 = sphi 0, %s80
      %s82 = sphi 0, %s80
      %s83 = sphi 0, %s82
      %s97 = sphi 0, %s83
      %s105 = sphi 0, %s107
      %s108 = sphi 0, %s105
      %s109 = sphi 0, %s108
      %s125 = sphi 0, %s109
    $region4: #{outconv_forward.1} parent=1 // loop_header_branch
      %14 = sbr.rel (%p12) target = $region8
    $region5: #{outconv_forward.1} parent=1 // loop_body
      %s16 = ssub.s32 %s11, 1
      %s17 = ssub.s32 %s11, 2
      %s24 = sadd.s32 1, %s19
      %p25 = scmp.ge.s32.totalorder %s24, 1
      %s26 = scalar_select %p25, 0, %s24
      %s27 = sadd.s32 1, %s18
      %s28 = scalar_select %p25, %s27, %s18
      %p29 = scmp.ge.s32.totalorder %s28, 2
      %s30 = scalar_select %p29, 0, %s28
      %s31 = ssub.s32 %s18, %s30
      %s32 = ssub.s32 %s19, %s26
      %s33 = sor.u32 %s31, %s32
      %p34 = scmp.eq.s32.totalorder %s33, 0
      %s36 = sadd.s32 %s35, 1
      %s37 = scalar_select %p34, %s35, %s36
      %p40 = pneg %p34
      %p41 = scmp.eq.s32.totalorder %s11, 1
      %p42 = por %p40, %p41
      %p43 = scmp.ne.s32.totalorder %s35, %s38
      %p44 = scmp.eq.s32.totalorder %s11, 0
      %p45 = por %p43, %p44
      %p46 = scmp.ne.s32.totalorder %s35, %s38
      %p47 = scmp.eq.s32.totalorder %s16, 1
      %p48 = por %p46, %p47
      %p49 = scmp.ne.s32.totalorder %s38, %s39
      %p50 = scmp.eq.s32.totalorder %s16, 0
      %p51 = por %p49, %p50
      %p52 = scmp.ne.s32.totalorder %s38, %s39
      %p53 = scmp.eq.s32.totalorder %s17, 1
      %p54 = por %p52, %p53
      %p56 = scmp.ne.s32.totalorder %s39, %s55
      %p57 = scmp.eq.s32.totalorder %s17, 0
      %p58 = por %p56, %p57
      %s60 = sadd.s32 %s59, 1
      %p63 = scmp.eq.s32.totalorder %s11, 1
      %p64 = scmp.ne.s32.totalorder %s59, %s61
      %p65 = scmp.eq.s32.totalorder %s11, 0
      %p66 = por %p64, %p65
      %p67 = scmp.ne.s32.totalorder %s59, %s61
      %p68 = scmp.eq.s32.totalorder %s16, 1
      %p69 = por %p67, %p68
      %p70 = scmp.ne.s32.totalorder %s61, %s62
      %p71 = scmp.eq.s32.totalorder %s16, 0
      %p72 = por %p70, %p71
      %p73 = scmp.ne.s32.totalorder %s61, %s62
      %p74 = scmp.eq.s32.totalorder %s17, 1
      %p75 = por %p73, %p74
      %p77 = scmp.ne.s32.totalorder %s62, %s76
      %p78 = scmp.eq.s32.totalorder %s17, 0
      %p79 = por %p77, %p78
      %s81 = sadd.s32 %s80, 1
      %p84 = scmp.eq.s32.totalorder %s11, 1
      %p85 = scmp.ne.s32.totalorder %s80, %s82
      %p86 = scmp.eq.s32.totalorder %s11, 0
      %p87 = por %p85, %p86
      %p88 = scmp.ne.s32.totalorder %s80, %s82
      %p89 = scmp.eq.s32.totalorder %s16, 1
      %p90 = por %p88, %p89
      %p91 = scmp.ne.s32.totalorder %s82, %s83
      %p92 = scmp.eq.s32.totalorder %s16, 0
      %p93 = por %p91, %p92
      %p94 = scmp.ne.s32.totalorder %s82, %s83
      %p95 = scmp.eq.s32.totalorder %s17, 1
      %p96 = por %p94, %p95
      %p98 = scmp.ne.s32.totalorder %s83, %s97
      %p99 = scmp.eq.s32.totalorder %s17, 0
      %p100 = por %p98, %p99
      %s101 = ssub.s32 %s18, %s30
      %s102 = ssub.s32 %s19, %s26
      %s103 = sor.u32 %s101, %s102
      %p104 = scmp.eq.s32.totalorder %s103, 0
      %s106 = sadd.s32 %s105, 1
      %s107 = scalar_select %p104, %s105, %s106
      %p110 = pneg %p104
      %p111 = scmp.eq.s32.totalorder %s11, 1
      %p112 = por %p110, %p111
      %p113 = scmp.ne.s32.totalorder %s105, %s108
      %p114 = scmp.eq.s32.totalorder %s11, 0
      %p115 = por %p113, %p114
      %p116 = scmp.ne.s32.totalorder %s105, %s108
      %p117 = scmp.eq.s32.totalorder %s16, 1
      %p118 = por %p116, %p117
      %p119 = scmp.ne.s32.totalorder %s108, %s109
      %p120 = scmp.eq.s32.totalorder %s16, 0
      %p121 = por %p119, %p120
      %p122 = scmp.ne.s32.totalorder %s108, %s109
      %p123 = scmp.eq.s32.totalorder %s17, 1
      %p124 = por %p122, %p123
      %p126 = scmp.ne.s32.totalorder %s109, %s125
      %p127 = scmp.eq.s32.totalorder %s17, 0
      %p128 = por %p126, %p127
      %p129 = scmp.le.s32.totalorder 1, %s11
      %p130 = scmp.lt.s32.totalorder %s11, 3
      %p131 = pnand %p129, %p130
      %p132 = pneg %p131
      // Predicated region
      $region9: #{outconv_forward.1} parent=5 // pred_check
        _
      $region10: #{outconv_forward.1} parent=5 // pred_check_branch
        %134 = sbr.rel (%p131) target = $region12
      $region11: #{outconv_forward.1} parent=5 // pred_region
        %s135 = ssub.s32 %s11, 1
        // Predicated region
        $region13: #{outconv_forward.1} parent=11 // pred_check
          %p136 = pneg %p72
        $region14: #{outconv_forward.1} parent=11 // pred_check_branch
          %138 = sbr.rel (%p136) target = $region16
        $region15: #{outconv_forward.1} parent=11 // pred_region
          %s140 = ssub.s32 64, 64
          %141 = vsyncadd [#allocation3], %s140
          %s143 = sshll.u32 %s1, 4
          %s144 = int_to_ptr.vmem [resolvable:$true] %s143
          %146 = dma.vmem_to_smem %s144, 64, [#allocation2], [#allocation3]
        $region16: #{outconv_forward.1} parent=11 // pred_fallthru
          _
        // Predicated region
        $region17: #{outconv_forward.1} parent=11 // pred_check
          %p147 = pneg %p93
        $region18: #{outconv_forward.1} parent=11 // pred_check_branch
          %149 = sbr.rel (%p147) target = $region20
        $region19: #{outconv_forward.1} parent=11 // pred_region
          %s151 = ssub.s32 16, 16
          %152 = vsyncadd [#allocation5], %s151
          %s154 = sshll.u32 %s2, 4
          %s155 = int_to_ptr.vmem [resolvable:$true] %s154
          %157 = dma.vmem_to_smem %s155, 16, [#allocation4], [#allocation5]
        $region20: #{outconv_forward.1} parent=11 // pred_fallthru
          _
      $region12: #{outconv_forward.1} parent=5 // pred_fallthru
        _
      %p158 = scmp.lt.s32.totalorder %s11, 2
      // Predicated region
      $region21: #{outconv_forward.1} parent=5 // pred_check
        %p159 = pneg %p158
      $region22: #{outconv_forward.1} parent=5 // pred_check_branch
        %161 = sbr.rel (%p159) target = $region24
      $region23: #{outconv_forward.1} parent=5 // pred_region
        // Predicated region
        $region25: #{outconv_forward.1} parent=23 // pred_check
          %p162 = pneg %p45
        $region26: #{outconv_forward.1} parent=23 // pred_check_branch
          %164 = sbr.rel (%p162) target = $region28
        $region27: #{outconv_forward.1} parent=23 // pred_region
          %p165 = scmp.lt.s32.totalorder %s18, 1
          %s166 = scalar_select %p165, %s18, 1
          %p167 = scmp.lt.s32.totalorder %s19, 0
          %s168 = scalar_select %p167, %s19, 0
          %s169 = smul.addr %s166, 4
          %s170 = sadd.s32 %s168, %s169
          %s171 = smul.addr %s170, 2
          %s172 = scalar_lea.vmem %s0, %s171
        $region28: #{outconv_forward.1} parent=23 // pred_fallthru
          _
      $region24: #{outconv_forward.1} parent=5 // pred_fallthru
        _
      %p173 = scmp.le.s32.totalorder 1, %s11
      %p174 = scmp.lt.s32.totalorder %s11, 3
      %p175 = pnand %p173, %p174
      %p176 = pneg %p175
      // Predicated region
      $region29: #{outconv_forward.1} parent=5 // pred_check
        _
      $region30: #{outconv_forward.1} parent=5 // pred_check_branch
        %178 = sbr.rel (%p175) target = $region32
      $region31: #{outconv_forward.1} parent=5 // pred_region
        %s179 = ssub.s32 %s11, 1
        // Predicated region
        $region33: #{outconv_forward.1} parent=31 // pred_check
          %p180 = pneg %p72
        $region34: #{outconv_forward.1} parent=31 // pred_check_branch
          %182 = sbr.rel (%p180) target = $region36
        $region35: #{outconv_forward.1} parent=31 // pred_region
          %183 = dma.done [#allocation3], 64
        $region36: #{outconv_forward.1} parent=31 // pred_fallthru
          _
        // Predicated region
        $region37: #{outconv_forward.1} parent=31 // pred_check
          %p184 = pneg %p93
        $region38: #{outconv_forward.1} parent=31 // pred_check_branch
          %186 = sbr.rel (%p184) target = $region40
        $region39: #{outconv_forward.1} parent=31 // pred_region
          %187 = dma.done [#allocation5], 16
        $region40: #{outconv_forward.1} parent=31 // pred_fallthru
          _
        %188 = sfence
        %p189 = scmp.lt.s32.totalorder %s20, 1
        %s190 = scalar_select %p189, %s20, 1
        %p191 = scmp.lt.s32.totalorder %s21, 0
        %s192 = scalar_select %p191, %s21, 0
        %s193 = smul.addr %s190, 4
        %s194 = sadd.s32 %s192, %s193
        %s195 = smul.addr %s194, 2
        %s196 = scalar_lea.vmem %s0, %s195
        %p197 = pneg %p51
        %p198 = pneg %p48
        %p199 = pneg %p72
        %p200 = pneg %p69
        %p201 = pneg %p93
        %p202 = pneg %p90
        %p203 = pneg %p121
        %p204 = pneg %p118
        %p205 = scmp.lt.s32.totalorder %s20, 1
        %s206 = scalar_select %p205, %s20, 1
        %p207 = scmp.lt.s32.totalorder %s21, 0
        %s208 = scalar_select %p207, %s21, 0
        %s209 = smul.addr %s206, 3
        %s210 = sadd.s32 %s208, %s209
        %s211 = smul.addr %s210, 2
        %s212 = scalar_lea.vmem %s3, %s211
        %p213 = scmp.lt.s32.totalorder %s20, 1
        %s214 = scalar_select %p213, %s20, 1
        %p215 = scmp.lt.s32.totalorder %s21, 0
        %s216 = scalar_select %p215, %s21, 0
        %s217 = smul.addr %s214, 4
        %s218 = sadd.s32 %s216, %s217
        %s219 = smul.addr %s218, 2
        %s220 = scalar_lea.vmem %s0, %s219
        %p221 = scmp.lt.s32.totalorder %s20, 1
        %s222 = scalar_select %p221, %s20, 1
        %p223 = scmp.lt.s32.totalorder %s21, 0
        %s224 = scalar_select %p223, %s21, 0
        %s225 = smul.addr %s222, 3
        %s226 = sadd.s32 %s224, %s225
        %s227 = smul.addr %s226, 2
        %s228 = scalar_lea.vmem %s3, %s227
        %v229 = vld [vmem:[%s220] sm:$0x3]
        %s230 = sld [smem:[#allocation2]]
        %v231 = vstv %s230
        %v232 = vmul.f32 %v229, %v231
        %s233 = sld [smem:[#allocation4]]
        %v234 = vstv %s233
        %v235 = vadd.f32 %v232, %v234
        %s236 = scalar_lea.vmem %s220, 2
        %v237 = vld [vmem:[%s236] sm:$0x3]
        %s238 = sld [smem:[#allocation2 + $0x1]]
        %v239 = vstv %s238
        %v240 = vmul.f32 %v237, %v239
        %v241 = vadd.f32 %v235, %v240
        %s242 = scalar_lea.vmem %s220, 4
        %v243 = vld [vmem:[%s242] sm:$0x3]
        %s244 = sld [smem:[#allocation2 + $0x2]]
        %v245 = vstv %s244
        %v246 = vmul.f32 %v243, %v245
        %v247 = vadd.f32 %v241, %v246
        %s248 = scalar_lea.vmem %s220, 6
        %v249 = vld [vmem:[%s248] sm:$0x3]
        %s250 = sld [smem:[#allocation2 + $0x3]]
        %v251 = vstv %s250
        %v252 = vmul.f32 %v249, %v251
        %v253 = vadd.f32 %v247, %v252
        %254 = vst [vmem:[%s228] sm:$0x3] %v253
        %v255 = vld [vmem:[%s220] sm:$0x3]
        %s256 = sld [smem:[#allocation2 + $0x80]]
        %v257 = vstv %s256
        %v258 = vmul.f32 %v255, %v257
        %s259 = sld [smem:[#allocation4 + $0x1]]
        %v260 = vstv %s259
        %v261 = vadd.f32 %v258, %v260
        %v262 = vld [vmem:[%s236] sm:$0x3]
        %s263 = sld [smem:[#allocation2 + $0x81]]
        %v264 = vstv %s263
        %v265 = vmul.f32 %v262, %v264
        %v266 = vadd.f32 %v261, %v265
        %v267 = vld [vmem:[%s242] sm:$0x3]
        %s268 = sld [smem:[#allocation2 + $0x82]]
        %v269 = vstv %s268
        %v270 = vmul.f32 %v267, %v269
        %v271 = vadd.f32 %v266, %v270
        %v272 = vld [vmem:[%s248] sm:$0x3]
        %s273 = sld [smem:[#allocation2 + $0x83]]
        %v274 = vstv %s273
        %v275 = vmul.f32 %v272, %v274
        %v276 = vadd.f32 %v271, %v275
        %s277 = scalar_lea.vmem %s228, 2
        %278 = vst [vmem:[%s277] sm:$0x3] %v276
        %v279 = vld [vmem:[%s220] sm:$0x3]
        %s280 = sld [smem:[#allocation2 + $0x100]]
        %v281 = vstv %s280
        %v282 = vmul.f32 %v279, %v281
        %s283 = sld [smem:[#allocation4 + $0x2]]
        %v284 = vstv %s283
        %v285 = vadd.f32 %v282, %v284
        %v286 = vld [vmem:[%s236] sm:$0x3]
        %s287 = sld [smem:[#allocation2 + $0x101]]
        %v288 = vstv %s287
        %v289 = vmul.f32 %v286, %v288
        %v290 = vadd.f32 %v285, %v289
        %v291 = vld [vmem:[%s242] sm:$0x3]
        %s292 = sld [smem:[#allocation2 + $0x102]]
        %v293 = vstv %s292
        %v294 = vmul.f32 %v291, %v293
        %v295 = vadd.f32 %v290, %v294
        %v296 = vld [vmem:[%s248] sm:$0x3]
        %s297 = sld [smem:[#allocation2 + $0x103]]
        %v298 = vstv %s297
        %v299 = vmul.f32 %v296, %v298
        %v300 = vadd.f32 %v295, %v299
        %s301 = scalar_lea.vmem %s228, 4
        %302 = vst [vmem:[%s301] sm:$0x3] %v300
        %p303 = scmp.lt.s32.totalorder %s20, 1
        %s304 = scalar_select %p303, %s20, 1
        %p305 = scmp.lt.s32.totalorder %s21, 0
        %s306 = scalar_select %p305, %s21, 0
        %s307 = smul.addr %s304, 3
        %s308 = sadd.s32 %s306, %s307
        %s309 = smul.addr %s308, 2
        %s310 = scalar_lea.vmem %s3, %s309
        // Predicated region
        $region41: #{outconv_forward.1} parent=31 // pred_check
          %p311 = pneg %p118
        $region42: #{outconv_forward.1} parent=31 // pred_check_branch
          %313 = sbr.rel (%p311) target = $region44
        $region43: #{outconv_forward.1} parent=31 // pred_region
          _
        $region44: #{outconv_forward.1} parent=31 // pred_fallthru
          _
      $region32: #{outconv_forward.1} parent=5 // pred_fallthru
        _
      %p314 = scmp.le.s32.totalorder 2, %s11
      // Predicated region
      $region45: #{outconv_forward.1} parent=5 // pred_check
        %p315 = pneg %p314
      $region46: #{outconv_forward.1} parent=5 // pred_check_branch
        %317 = sbr.rel (%p315) target = $region48
      $region47: #{outconv_forward.1} parent=5 // pred_region
        %s318 = ssub.s32 %s11, 2
        // Predicated region
        $region49: #{outconv_forward.1} parent=47 // pred_check
          %p319 = pneg %p124
        $region50: #{outconv_forward.1} parent=47 // pred_check_branch
          %321 = sbr.rel (%p319) target = $region52
        $region51: #{outconv_forward.1} parent=47 // pred_region
          %p322 = scmp.lt.s32.totalorder %s22, 1
          %s323 = scalar_select %p322, %s22, 1
          %p324 = scmp.lt.s32.totalorder %s23, 0
          %s325 = scalar_select %p324, %s23, 0
          %s326 = smul.addr %s323, 3
          %s327 = sadd.s32 %s325, %s326
          %s328 = smul.addr %s327, 2
          %s329 = scalar_lea.vmem %s3, %s328
        $region52: #{outconv_forward.1} parent=47 // pred_fallthru
          _
      $region48: #{outconv_forward.1} parent=5 // pred_fallthru
        _
    $region6: #{outconv_forward.1} parent=1 // loop_footer
      %s15 = sadd.s32 1, %s11
    $region7: #{outconv_forward.1} parent=1 // loop_footer_branch
      %10 = sbr.rel target = $region3
    $region8: #{outconv_forward.1} parent=1 // loop_exit
      _
    %330 = vsyncpa [#allocation3], 1
    %s331 = scalar_lea.sflag [#allocation3], 1
    %332 = vsyncpa %s331, 1
    %333 = vsyncpa [#allocation5], 1

</llo_original>
